<compile_context>
chip_gen: v5e
topology: v5e:2x2
jax: 0.10.0
libtpu: 0.0.40
codegen_flags: <defaults>
</compile_context>

<pallas_src>
import jax
import jax.numpy as jnp
from jax.experimental import pallas as pl
from jax.experimental.pallas import tpu as pltpu

JOB_FEATURES = 8
MAX_QUEUE_SIZE = 128


# ---------------------------------------------------------------------------
# Fused kernel: feature-major MLP -> masked logits (TB, Q) + logp_a (TB, 1)
# ---------------------------------------------------------------------------
def _actor_kernel(x_ref, mask_ref, act_ref,
                  w1_ref, b1_ref, w2_ref, b2_ref,
                  w3_ref, b3_ref, w4_ref, b4_ref,
                  logits_ref, logp_ref):
    x = x_ref[...]                                       # (F, TB*Q), compute dtype
    cd = x.dtype

    # layers 1..3: h = relu(W @ x + b); MXU fed in bf16, accumulate/bias/relu in f32
    h = jnp.dot(w1_ref[...], x, preferred_element_type=jnp.float32) + b1_ref[...]
    h = jnp.maximum(h, 0.0).astype(cd)                   # (32, TB*Q)
    h = jnp.dot(w2_ref[...], h, preferred_element_type=jnp.float32) + b2_ref[...]
    h = jnp.maximum(h, 0.0).astype(cd)                   # (16, TB*Q)
    h = jnp.dot(w3_ref[...], h, preferred_element_type=jnp.float32) + b3_ref[...]
    h = jnp.maximum(h, 0.0).astype(cd)                   # (8,  TB*Q)
    h4 = jnp.dot(w4_ref[...], h, preferred_element_type=jnp.float32) + b4_ref[...]
    # h4: (1, TB*Q) f32

    tb, q = logits_ref.shape
    scores = h4.reshape(tb, q)                           # sublane-pack relayout (Q == 128 lanes)

    # masked Categorical logits in sample-major (TB, Q); mask {0,1} is exact in bf16
    mask = mask_ref[...].astype(jnp.float32)             # (TB, Q)
    logits = scores + (mask - 1.0) * 1000000.0
    logits_ref[...] = logits

    # fused log_softmax + log-prob gather (no HBM round trip of the logits)
    m = jnp.max(logits, axis=-1, keepdims=True)
    lse = m + jnp.log(jnp.sum(jnp.exp(logits - m), axis=-1, keepdims=True))
    col = jax.lax.broadcasted_iota(jnp.int32, logits.shape, 1)
    picked = jnp.sum(jnp.where(col == act_ref[...], logits, 0.0),
                     axis=-1, keepdims=True)             # logits[act], no one-hot matmul
    logp_ref[...] = picked - lse                         # (TB, 1)


def _batch_tile(B, block_b):
    """Pick a batch tile TB (multiple of 8, <= block_b) and the grid length.

    >= 2 grid steps whenever the batch is large enough (v7x megacore sharding +
    DMA/compute overlap); a single exact block for tiny batches (block dims equal
    to the full array dims are exempt from the 8-sublane divisibility rule)."""
    if B > 64:
        nblk = max(2, pl.cdiv(B, block_b))
    else:
        nblk = 1
    if nblk == 1:
        tb = B
    else:
        tb = pl.cdiv(pl.cdiv(B, nblk), 8) * 8
    return tb, pl.cdiv(B, tb)


def rl_actor_forward(obs, mask, act, params, *,
                     block_b=256, compute_dtype=jnp.bfloat16):
    """obs: (B, Q*F) float, mask: (B, Q) float in {0,1} (f32 or bf16), act: (B,) int.

    Returns (logits, logp_a): the masked Categorical logits (the distribution
    parameters) and logp_a = log_softmax(logits)[act].
    """
    B = obs.shape[0]
    Q, F = MAX_QUEUE_SIZE, JOB_FEATURES
    w1, b1, w2, b2, w3, b3, w4, b4 = params

    act2 = act.astype(jnp.int32).reshape(B, 1)

    TB, grid_b = _batch_tile(B, block_b)
    BN = TB * Q

    # Single fused cast+transpose in XLA: (B, Q*F) -> (B*Q, F) [free reshape] -> (F, B*Q)
    # TODO(synk): fuse this swizzle into obs's producer (or use an in-kernel
    # einshape deinterleave) to remove the last extra HBM pass over obs.
    obs_fm = obs.reshape(B * Q, F).astype(compute_dtype).T          # (F, B*Q)

    wc = tuple(w.astype(compute_dtype) for w in (w1, w2, w3, w4))
    bf = tuple(b.astype(jnp.float32) for b in (b1, b2, b3, b4))

    const = lambda shape: pl.BlockSpec(shape, lambda i: (0, 0))      # grid-invariant

    logits, logp = pl.pallas_call(
        _actor_kernel,
        grid=(grid_b,),
        in_specs=[
            pl.BlockSpec((F, BN), lambda i: (0, i)),                 # obs, feature-major
            pl.BlockSpec((TB, Q), lambda i: (i, 0)),                 # mask, sample-major
            pl.BlockSpec((TB, 1), lambda i: (i, 0)),                 # act indices
            const(wc[0].shape), const(bf[0].shape),
            const(wc[1].shape), const(bf[1].shape),
            const(wc[2].shape), const(bf[2].shape),
            const(wc[3].shape), const(bf[3].shape),
        ],
        out_specs=(pl.BlockSpec((TB, Q), lambda i: (i, 0)),          # lane+sublane-dense logits
                   pl.BlockSpec((TB, 1), lambda i: (i, 0))),         # logp_a
        out_shape=(jax.ShapeDtypeStruct((B, Q), jnp.float32),
                   jax.ShapeDtypeStruct((B, 1), jnp.float32)),
        compiler_params=pltpu.CompilerParams(
            dimension_semantics=("parallel",),
            vmem_limit_bytes=32 * 1024 * 1024),
    )(obs_fm, mask, act2, wc[0], bf[0], wc[1], bf[1], wc[2], bf[2], wc[3], bf[3])

    return logits, logp.reshape(B)


def init_params(key):
    """nn.Linear default init: U(-1/sqrt(in), 1/sqrt(in)); weights (out, in),
    biases stored as (out, 1) columns (kept f32)."""
    dims = [(JOB_FEATURES, 32), (32, 16), (16, 8), (8, 1)]
    params = []
    for (din, dout) in dims:
        key, kw, kb = jax.random.split(key, 3)
        bound = 1.0 / jnp.sqrt(din)
        w = jax.random.uniform(kw, (dout, din), jnp.float32, -bound, bound)
        b = jax.random.uniform(kb, (dout, 1), jnp.float32, -bound, bound)
        params += [w, b]
    return tuple(params)


def _reference(obs, mask, act, params, compute_dtype=jnp.float32):
    """Pure-JAX reference of the PyTorch forward.  With compute_dtype=bf16 it
    mirrors the kernel's precision (bf16 inputs/weights, f32 accumulation)."""
    w1, b1, w2, b2, w3, b3, w4, b4 = params
    cd = compute_dtype
    mask = mask.astype(jnp.float32)
    x = obs.reshape(-1, MAX_QUEUE_SIZE, JOB_FEATURES).astype(cd)
    for (w, b) in ((w1, b1), (w2, b2), (w3, b3)):
        h = jnp.dot(x, w.astype(cd).T, preferred_element_type=jnp.float32) + b[:, 0]
        x = jax.nn.relu(h).astype(cd)
    logits = (jnp.dot(x, w4.astype(cd).T, preferred_element_type=jnp.float32)
              + b4[:, 0])[..., 0]
    logits = logits + (mask - 1.0) * 1000000.0
    logp = jax.nn.log_softmax(logits, axis=-1)
    logp_a = jnp.take_along_axis(logp, act[:, None].astype(jnp.int32), axis=-1)[:, 0]
    return logits, logp_a


if __name__ == "__main__":
    key = jax.random.PRNGKey(0)
    kp, ko, km, ka = jax.random.split(key, 4)
    params = init_params(kp)

    # B=2: tiny single exact block; B=300: multi-block grid + ragged last block.
    for B in (2, 300):
        kob = jax.random.fold_in(ko, B)
        kmb = jax.random.fold_in(km, B)
        kab = jax.random.fold_in(ka, B)

        obs = jax.random.normal(kob, (B, MAX_QUEUE_SIZE * JOB_FEATURES), jnp.float32)
        # mask shipped as bf16: {0,1} is exact, halves its HBM traffic
        mask = (jax.random.uniform(kmb, (B, MAX_QUEUE_SIZE)) > 0.5).astype(jnp.bfloat16)
        mask = mask.at[:, 0].set(1.0)  # at least one valid action per sample
        act = jax.random.randint(kab, (B,), 0, MAX_QUEUE_SIZE).astype(jnp.int32)

        logits, logp_a = rl_actor_forward(obs, mask, act, params)
        jax.block_until_ready((logits, logp_a))

        # Tight check vs. a precision-matched reference (bf16 inputs/weights,
        # f32 accumulation == exactly what the kernel computes).
        ref_l, ref_lp = _reference(obs, mask, act, params, jnp.bfloat16)
        assert jnp.allclose(logits, ref_l, atol=2e-3, rtol=2e-3)
        assert jnp.allclose(logp_a, ref_lp, atol=2e-3, rtol=2e-3)

        # Loose sanity check vs. the exact f32 module math (only deviation is the
        # bf16 rounding of obs/weights used for MXU/bandwidth efficiency).
        ref_l32, ref_lp32 = _reference(obs, mask, act, params, jnp.float32)
        assert jnp.allclose(logits, ref_l32, atol=3e-2, rtol=3e-2)
        assert jnp.allclose(logp_a, ref_lp32, atol=3e-2, rtol=3e-2)

    print("KERNEL_OK")
</pallas_src>

<mosaic_0001>
module attributes {stable_mosaic.version = 11 : i64} {
  func.func @_actor_kernel(%arg0: i32, %arg1: memref<8x256xbf16, #tpu.memory_space<vmem>>, %arg2: memref<2x128xbf16, #tpu.memory_space<vmem>>, %arg3: memref<2x1xi32, #tpu.memory_space<vmem>>, %arg4: memref<32x8xbf16, #tpu.memory_space<vmem>>, %arg5: memref<32x1xf32, #tpu.memory_space<vmem>>, %arg6: memref<16x32xbf16, #tpu.memory_space<vmem>>, %arg7: memref<16x1xf32, #tpu.memory_space<vmem>>, %arg8: memref<8x16xbf16, #tpu.memory_space<vmem>>, %arg9: memref<8x1xf32, #tpu.memory_space<vmem>>, %arg10: memref<1x8xbf16, #tpu.memory_space<vmem>>, %arg11: memref<1x1xf32, #tpu.memory_space<vmem>>, %arg12: memref<2x128xf32, #tpu.memory_space<vmem>>, %arg13: memref<2x1xf32, #tpu.memory_space<vmem>>) attributes {dimension_semantics = [#tpu.dimension_semantics<parallel>], iteration_bounds = array<i64: 1>, scalar_prefetch = 0 : i64, scratch_operands = 0 : i64, tpu.core_type = #tpu.core_type<tc>, window_params = [{transform_indices = @transform_0, window_bounds = array<i64: 8, 256>}, {transform_indices = @transform_1, window_bounds = array<i64: 2, 128>}, {transform_indices = @transform_2, window_bounds = array<i64: 2, 1>}, {pipeline_mode = #tpu.pipeline_mode<synchronous>, transform_indices = @transform_3, window_bounds = array<i64: 32, 8>}, {pipeline_mode = #tpu.pipeline_mode<synchronous>, transform_indices = @transform_4, window_bounds = array<i64: 32, 1>}, {pipeline_mode = #tpu.pipeline_mode<synchronous>, transform_indices = @transform_5, window_bounds = array<i64: 16, 32>}, {pipeline_mode = #tpu.pipeline_mode<synchronous>, transform_indices = @transform_6, window_bounds = array<i64: 16, 1>}, {pipeline_mode = #tpu.pipeline_mode<synchronous>, transform_indices = @transform_7, window_bounds = array<i64: 8, 16>}, {pipeline_mode = #tpu.pipeline_mode<synchronous>, transform_indices = @transform_8, window_bounds = array<i64: 8, 1>}, {pipeline_mode = #tpu.pipeline_mode<synchronous>, transform_indices = @transform_9, window_bounds = array<i64: 1, 8>}, {pipeline_mode = #tpu.pipeline_mode<synchronous>, transform_indices = @transform_10, window_bounds = array<i64: 1, 1>}, {transform_indices = @transform_11, window_bounds = array<i64: 2, 128>}, {transform_indices = @transform_12, window_bounds = array<i64: 2, 1>}]} {
    %c0 = arith.constant 0 : index
    %c0_0 = arith.constant 0 : index
    %0 = vector.load %arg1[%c0, %c0_0] : memref<8x256xbf16, #tpu.memory_space<vmem>>, vector<8x256xbf16>
    %c0_1 = arith.constant 0 : index
    %c0_2 = arith.constant 0 : index
    %1 = vector.load %arg4[%c0_1, %c0_2] : memref<32x8xbf16, #tpu.memory_space<vmem>>, vector<32x8xbf16>
    %cst = arith.constant dense<0.000000e+00> : vector<32x256xf32>
    %2 = tpu.matmul %1, %0, %cst {dimension_numbers = #tpu.dot_dimension_numbers<[1], [0], [0], [1], [0, 0, 1, 1], [], []>} : vector<32x8xbf16>, vector<8x256xbf16>, vector<32x256xf32> -> vector<32x256xf32>
    %c0_3 = arith.constant 0 : index
    %c0_4 = arith.constant 0 : index
    %3 = vector.load %arg5[%c0_3, %c0_4] : memref<32x1xf32, #tpu.memory_space<vmem>>, vector<32x1xf32>
    %4 = vector.broadcast %3 : vector<32x1xf32> to vector<32x256xf32>
    %5 = arith.addf %2, %4 : vector<32x256xf32>
    %cst_5 = arith.constant 0.000000e+00 : f32
    %6 = vector.broadcast %cst_5 : f32 to vector<32x256xf32>
    %7 = arith.maximumf %5, %6 : vector<32x256xf32>
    %8 = arith.truncf %7 : vector<32x256xf32> to vector<32x256xbf16>
    %c0_6 = arith.constant 0 : index
    %c0_7 = arith.constant 0 : index
    %9 = vector.load %arg6[%c0_6, %c0_7] : memref<16x32xbf16, #tpu.memory_space<vmem>>, vector<16x32xbf16>
    %cst_8 = arith.constant dense<0.000000e+00> : vector<16x256xf32>
    %10 = tpu.matmul %9, %8, %cst_8 {dimension_numbers = #tpu.dot_dimension_numbers<[1], [0], [0], [1], [0, 0, 1, 1], [], []>} : vector<16x32xbf16>, vector<32x256xbf16>, vector<16x256xf32> -> vector<16x256xf32>
    %c0_9 = arith.constant 0 : index
    %c0_10 = arith.constant 0 : index
    %11 = vector.load %arg7[%c0_9, %c0_10] : memref<16x1xf32, #tpu.memory_space<vmem>>, vector<16x1xf32>
    %12 = vector.broadcast %11 : vector<16x1xf32> to vector<16x256xf32>
    %13 = arith.addf %10, %12 : vector<16x256xf32>
    %cst_11 = arith.constant 0.000000e+00 : f32
    %14 = vector.broadcast %cst_11 : f32 to vector<16x256xf32>
    %15 = arith.maximumf %13, %14 : vector<16x256xf32>
    %16 = arith.truncf %15 : vector<16x256xf32> to vector<16x256xbf16>
    %c0_12 = arith.constant 0 : index
    %c0_13 = arith.constant 0 : index
    %17 = vector.load %arg8[%c0_12, %c0_13] : memref<8x16xbf16, #tpu.memory_space<vmem>>, vector<8x16xbf16>
    %cst_14 = arith.constant dense<0.000000e+00> : vector<8x256xf32>
    %18 = tpu.matmul %17, %16, %cst_14 {dimension_numbers = #tpu.dot_dimension_numbers<[1], [0], [0], [1], [0, 0, 1, 1], [], []>} : vector<8x16xbf16>, vector<16x256xbf16>, vector<8x256xf32> -> vector<8x256xf32>
    %c0_15 = arith.constant 0 : index
    %c0_16 = arith.constant 0 : index
    %19 = vector.load %arg9[%c0_15, %c0_16] : memref<8x1xf32, #tpu.memory_space<vmem>>, vector<8x1xf32>
    %20 = vector.broadcast %19 : vector<8x1xf32> to vector<8x256xf32>
    %21 = arith.addf %18, %20 : vector<8x256xf32>
    %cst_17 = arith.constant 0.000000e+00 : f32
    %22 = vector.broadcast %cst_17 : f32 to vector<8x256xf32>
    %23 = arith.maximumf %21, %22 : vector<8x256xf32>
    %24 = arith.truncf %23 : vector<8x256xf32> to vector<8x256xbf16>
    %c0_18 = arith.constant 0 : index
    %c0_19 = arith.constant 0 : index
    %25 = vector.load %arg10[%c0_18, %c0_19] : memref<1x8xbf16, #tpu.memory_space<vmem>>, vector<1x8xbf16>
    %cst_20 = arith.constant dense<0.000000e+00> : vector<1x256xf32>
    %26 = tpu.matmul %25, %24, %cst_20 {dimension_numbers = #tpu.dot_dimension_numbers<[1], [0], [0], [1], [0, 0, 1, 1], [], []>} : vector<1x8xbf16>, vector<8x256xbf16>, vector<1x256xf32> -> vector<1x256xf32>
    %c0_21 = arith.constant 0 : index
    %c0_22 = arith.constant 0 : index
    %27 = vector.load %arg11[%c0_21, %c0_22] : memref<1x1xf32, #tpu.memory_space<vmem>>, vector<1x1xf32>
    %28 = vector.broadcast %27 : vector<1x1xf32> to vector<1x256xf32>
    %29 = arith.addf %26, %28 : vector<1x256xf32>
    %30 = vector.shape_cast %29 : vector<1x256xf32> to vector<2x128xf32>
    %c0_23 = arith.constant 0 : index
    %c0_24 = arith.constant 0 : index
    %31 = vector.load %arg2[%c0_23, %c0_24] : memref<2x128xbf16, #tpu.memory_space<vmem>>, vector<2x128xbf16>
    %32 = arith.extf %31 : vector<2x128xbf16> to vector<2x128xf32>
    %cst_25 = arith.constant 1.000000e+00 : f32
    %33 = vector.broadcast %cst_25 : f32 to vector<2x128xf32>
    %34 = arith.subf %32, %33 : vector<2x128xf32>
    %cst_26 = arith.constant 1.000000e+06 : f32
    %35 = vector.broadcast %cst_26 : f32 to vector<2x128xf32>
    %36 = arith.mulf %34, %35 : vector<2x128xf32>
    %37 = arith.addf %30, %36 : vector<2x128xf32>
    %c0_27 = arith.constant 0 : index
    %c0_28 = arith.constant 0 : index
    %38 = vector.load %arg12[%c0_27, %c0_28] : memref<2x128xf32, #tpu.memory_space<vmem>>, vector<2x128xf32>
    tpu.vector_store %arg12[%c0_27, %c0_28], %37 {strides = array<i32>} : memref<2x128xf32, #tpu.memory_space<vmem>>, vector<2x128xf32>,
    %cst_29 = arith.constant dense<0xFF800000> : vector<2xf32>
    %39 = vector.multi_reduction <maximumf>, %37, %cst_29 [1] : vector<2x128xf32> to vector<2xf32>
    %40 = vector.shape_cast %39 : vector<2xf32> to vector<2x1xf32>
    %41 = vector.broadcast %40 : vector<2x1xf32> to vector<2x128xf32>
    %42 = arith.subf %37, %41 : vector<2x128xf32>
    %43 = math.exp %42 : vector<2x128xf32>
    %cst_30 = arith.constant dense<0.000000e+00> : vector<2xf32>
    %44 = vector.multi_reduction <add>, %43, %cst_30 [1] : vector<2x128xf32> to vector<2xf32>
    %45 = vector.shape_cast %44 : vector<2xf32> to vector<2x1xf32>
    %46 = math.log %45 : vector<2x1xf32>
    %47 = arith.addf %40, %46 : vector<2x1xf32>
    %48 = tpu.iota {dimensions = array<i32: 1>} : vector<2x128xi32>
    %c0_31 = arith.constant 0 : index
    %c0_32 = arith.constant 0 : index
    %49 = vector.load %arg3[%c0_31, %c0_32] : memref<2x1xi32, #tpu.memory_space<vmem>>, vector<2x1xi32>
    %50 = vector.broadcast %49 : vector<2x1xi32> to vector<2x128xi32>
    %51 = arith.cmpi eq, %48, %50 : vector<2x128xi32>
    %cst_33 = arith.constant 0.000000e+00 : f32
    %52 = vector.broadcast %cst_33 : f32 to vector<2x128xf32>
    %53 = arith.select %51, %37, %52 : vector<2x128xi1>, vector<2x128xf32>
    %cst_34 = arith.constant dense<0.000000e+00> : vector<2xf32>
    %54 = vector.multi_reduction <add>, %53, %cst_34 [1] : vector<2x128xf32> to vector<2xf32>
    %55 = vector.shape_cast %54 : vector<2xf32> to vector<2x1xf32>
    %56 = arith.subf %55, %47 : vector<2x1xf32>
    %c0_35 = arith.constant 0 : index
    %c0_36 = arith.constant 0 : index
    %57 = vector.load %arg13[%c0_35, %c0_36] : memref<2x1xf32, #tpu.memory_space<vmem>>, vector<2x1xf32>
    tpu.vector_store %arg13[%c0_35, %c0_36], %56 {strides = array<i32>} : memref<2x1xf32, #tpu.memory_space<vmem>>, vector<2x1xf32>,
    return
  }
  func.func @transform_0(%arg0: i32) -> (i32, i32) {
    %c0_i32 = arith.constant 0 : i32
    %c0_i32_0 = arith.constant 0 : i32
    return %c0_i32, %arg0 : i32, i32
  }
  func.func @transform_1(%arg0: i32) -> (i32, i32) {
    %c0_i32 = arith.constant 0 : i32
    %c0_i32_0 = arith.constant 0 : i32
    return %arg0, %c0_i32 : i32, i32
  }
  func.func @transform_2(%arg0: i32) -> (i32, i32) {
    %c0_i32 = arith.constant 0 : i32
    %c0_i32_0 = arith.constant 0 : i32
    return %arg0, %c0_i32 : i32, i32
  }
  func.func @transform_3(%arg0: i32) -> (i32, i32) {
    %c0_i32 = arith.constant 0 : i32
    %c0_i32_0 = arith.constant 0 : i32
    %c0_i32_1 = arith.constant 0 : i32
    return %c0_i32, %c0_i32_0 : i32, i32
  }
  func.func @transform_4(%arg0: i32) -> (i32, i32) {
    %c0_i32 = arith.constant 0 : i32
    %c0_i32_0 = arith.constant 0 : i32
    %c0_i32_1 = arith.constant 0 : i32
    return %c0_i32, %c0_i32_0 : i32, i32
  }
  func.func @transform_5(%arg0: i32) -> (i32, i32) {
    %c0_i32 = arith.constant 0 : i32
    %c0_i32_0 = arith.constant 0 : i32
    %c0_i32_1 = arith.constant 0 : i32
    return %c0_i32, %c0_i32_0 : i32, i32
  }
  func.func @transform_6(%arg0: i32) -> (i32, i32) {
    %c0_i32 = arith.constant 0 : i32
    %c0_i32_0 = arith.constant 0 : i32
    %c0_i32_1 = arith.constant 0 : i32
    return %c0_i32, %c0_i32_0 : i32, i32
  }
  func.func @transform_7(%arg0: i32) -> (i32, i32) {
    %c0_i32 = arith.constant 0 : i32
    %c0_i32_0 = arith.constant 0 : i32
    %c0_i32_1 = arith.constant 0 : i32
    return %c0_i32, %c0_i32_0 : i32, i32
  }
  func.func @transform_8(%arg0: i32) -> (i32, i32) {
    %c0_i32 = arith.constant 0 : i32
    %c0_i32_0 = arith.constant 0 : i32
    %c0_i32_1 = arith.constant 0 : i32
    return %c0_i32, %c0_i32_0 : i32, i32
  }
  func.func @transform_9(%arg0: i32) -> (i32, i32) {
    %c0_i32 = arith.constant 0 : i32
    %c0_i32_0 = arith.constant 0 : i32
    %c0_i32_1 = arith.constant 0 : i32
    return %c0_i32, %c0_i32_0 : i32, i32
  }
  func.func @transform_10(%arg0: i32) -> (i32, i32) {
    %c0_i32 = arith.constant 0 : i32
    %c0_i32_0 = arith.constant 0 : i32
    %c0_i32_1 = arith.constant 0 : i32
    return %c0_i32, %c0_i32_0 : i32, i32
  }
  func.func @transform_11(%arg0: i32) -> (i32, i32) {
    %c0_i32 = arith.constant 0 : i32
    %c0_i32_0 = arith.constant 0 : i32
    return %arg0, %c0_i32 : i32, i32
  }
  func.func @transform_12(%arg0: i32) -> (i32, i32) {
    %c0_i32 = arith.constant 0 : i32
    %c0_i32_0 = arith.constant 0 : i32
    return %arg0, %c0_i32 : i32, i32
  }
}

</mosaic_0001>

<llo_original>
// kernel: tpu_custom_call.1
$region0: #{tpu_custom_call.1}
  #allocation0 [shape = 'u32[]', space=smem, size = 0x4, offset = 0x4, fixed_abs, tag = 'smem constant byte address 0x4 - core index']
  #allocation1 [shape = 'u32[72,128]{1,0:T(1,128)}', space=vmem, size = 0x9000, scoped, tag = 'internal scratch']
  #allocation2 [shape = 'f32[1,1]{1,0:T(1,128)S(1)}', space=vmem, size = 0x200, scoped, tag = 'scoped memory for tpu_custom_call.1']
  %s0 = inlined_call_operand.vmem [shape: bf16[8,256], index: 0, kind: input, shape index: {}]
  %s1 = inlined_call_operand.vmem [shape: bf16[2,128], index: 1, kind: input, shape index: {}]
  %s2 = inlined_call_operand.vmem [shape: s32[2,1], index: 2, kind: input, shape index: {}]
  %s3 = inlined_call_operand.vmem [shape: bf16[32,8], index: 3, kind: input, shape index: {}]
  %s4 = inlined_call_operand.vmem [shape: f32[32,1], index: 4, kind: input, shape index: {}]
  %s5 = inlined_call_operand.vmem [shape: bf16[16,32], index: 5, kind: input, shape index: {}]
  %s6 = inlined_call_operand.vmem [shape: f32[16,1], index: 6, kind: input, shape index: {}]
  %s7 = inlined_call_operand.vmem [shape: bf16[8,16], index: 7, kind: input, shape index: {}]
  %s8 = inlined_call_operand.vmem [shape: f32[8,1], index: 8, kind: input, shape index: {}]
  %s9 = inlined_call_operand.vmem [shape: bf16[1,8], index: 9, kind: input, shape index: {}]
  %s10 = inlined_call_operand.<no memory space> [shape: f32[1,1], index: 10, kind: input, shape index: {}]
  %s11 = inlined_call_operand.hbm [shape: f32[2,128], index: 11, kind: output, shape index: {0}]
  %s12 = inlined_call_operand.vmem [shape: f32[2,1], index: 12, kind: output, shape index: {1}]
  %13 = xla_tuple %s11, %s12
  %s14 = sld [smem:[#allocation0]]
  $region62: #{tpu_custom_call.1} parent=0
    _
  %s16 = ssub.s32 1, %s14
  %s17 = scalar_select 0, %s16, %s14
  %v18 = vstv %s10
  %19 = vst [vmem:[#allocation2] sm:$0x1] %v18
  $region1: #{tpu_custom_call.1} parent=0
    #allocation3 [shape = 'u8[1024]{0}', space=vmem, size = 0x400, scoped, tag = 'output window, operand 0, single buffered']
    #allocation4 [shape = 's32[1]{0}', space=sflag, size = 0x4, scoped, tag = 'scoped memory for tpu_custom_call.1']
    %20 = vsyncpa [#allocation4], 0
    // Predicated region
    $region2: #{tpu_custom_call.1} parent=1 // pred_check
      _
    $region3: #{tpu_custom_call.1} parent=1 // pred_check_branch
      %22 = sbr.rel (0) target = $region5
    $region4: #{tpu_custom_call.1} parent=1 // pred_region
      _
    $region5: #{tpu_custom_call.1} parent=1 // pred_fallthru
      _
    // Predicated region
    $region6: #{tpu_custom_call.1} parent=1 // pred_check
      _
    $region7: #{tpu_custom_call.1} parent=1 // pred_check_branch
      %24 = sbr.rel (0) target = $region9
    $region8: #{tpu_custom_call.1} parent=1 // pred_region
      _
    $region9: #{tpu_custom_call.1} parent=1 // pred_fallthru
      _
    // Predicated region
    $region10: #{tpu_custom_call.1} parent=1 // pred_check
      _
    $region11: #{tpu_custom_call.1} parent=1 // pred_check_branch
      %26 = sbr.rel (0) target = $region13
    $region12: #{tpu_custom_call.1} parent=1 // pred_region
      _
    $region13: #{tpu_custom_call.1} parent=1 // pred_fallthru
      _
    // Predicated region
    $region14: #{tpu_custom_call.1} parent=1 // pred_check
      _
    $region15: #{tpu_custom_call.1} parent=1 // pred_check_branch
      %28 = sbr.rel (0) target = $region17
    $region16: #{tpu_custom_call.1} parent=1 // pred_region
      _
    $region17: #{tpu_custom_call.1} parent=1 // pred_fallthru
      _
    // Predicated region
    $region18: #{tpu_custom_call.1} parent=1 // pred_check
      _
    $region19: #{tpu_custom_call.1} parent=1 // pred_check_branch
      %30 = sbr.rel (0) target = $region21
    $region20: #{tpu_custom_call.1} parent=1 // pred_region
      _
    $region21: #{tpu_custom_call.1} parent=1 // pred_fallthru
      _
    // Predicated region
    $region22: #{tpu_custom_call.1} parent=1 // pred_check
      _
    $region23: #{tpu_custom_call.1} parent=1 // pred_check_branch
      %32 = sbr.rel (0) target = $region25
    $region24: #{tpu_custom_call.1} parent=1 // pred_region
      _
    $region25: #{tpu_custom_call.1} parent=1 // pred_fallthru
      _
    // Predicated region
    $region26: #{tpu_custom_call.1} parent=1 // pred_check
      _
    $region27: #{tpu_custom_call.1} parent=1 // pred_check_branch
      %34 = sbr.rel (0) target = $region29
    $region28: #{tpu_custom_call.1} parent=1 // pred_region
      _
    $region29: #{tpu_custom_call.1} parent=1 // pred_fallthru
      _
    // Predicated region
    $region30: #{tpu_custom_call.1} parent=1 // pred_check
      _
    $region31: #{tpu_custom_call.1} parent=1 // pred_check_branch
      %36 = sbr.rel (0) target = $region33
    $region32: #{tpu_custom_call.1} parent=1 // pred_region
      _
    $region33: #{tpu_custom_call.1} parent=1 // pred_fallthru
      _
    // Predicated region
    $region34: #{tpu_custom_call.1} parent=1 // pred_check
      _
    $region35: #{tpu_custom_call.1} parent=1 // pred_check_branch
      %38 = sbr.rel (0) target = $region37
    $region36: #{tpu_custom_call.1} parent=1 // pred_region
      _
    $region37: #{tpu_custom_call.1} parent=1 // pred_fallthru
      _
    // Predicated region
    $region38: #{tpu_custom_call.1} parent=1 // pred_check
      _
    $region39: #{tpu_custom_call.1} parent=1 // pred_check_branch
      %40 = sbr.rel (0) target = $region41
    $region40: #{tpu_custom_call.1} parent=1 // pred_region
      _
    $region41: #{tpu_custom_call.1} parent=1 // pred_fallthru
      _
    // Predicated region
    $region42: #{tpu_custom_call.1} parent=1 // pred_check
      _
    $region43: #{tpu_custom_call.1} parent=1 // pred_check_branch
      %42 = sbr.rel (0) target = $region45
    $region44: #{tpu_custom_call.1} parent=1 // pred_region
      _
    $region45: #{tpu_custom_call.1} parent=1 // pred_fallthru
      _
    %v44 = vld [vmem:[%s0] sm:$0xff]
    %v45 = vld [vmem:[%s3] sm:$0xf]
    %v46 = vld [vmem:[%s3 + $0x4] sm:$0xf]
    %v47 = vld [vmem:[%s3 + $0x8] sm:$0xf]
    %v48 = vld [vmem:[%s3 + $0xc] sm:$0xf]
    %v49 = vld [vmem:[%s4] sm:$0xff]
    %v50 = vld [vmem:[%s4 + $0x8] sm:$0xff]
    %v51 = vld [vmem:[%s4 + $0x10] sm:$0xff]
    %v52 = vld [vmem:[%s4 + $0x18] sm:$0xff]
    %54 = vset.pattern.permute.xlu0 0
    %55 = vperm.xlu0 %54, %v49
    %v56 = vpop.permute.xlu0 %55
    %59 = vset.pattern.permute.xlu0 0
    %60 = vperm.xlu0 %59, %v50
    %v61 = vpop.permute.xlu0 %60
    %64 = vset.pattern.permute.xlu0 0
    %65 = vperm.xlu0 %64, %v51
    %v66 = vpop.permute.xlu0 %65
    %69 = vset.pattern.permute.xlu0 0
    %70 = vperm.xlu0 %69, %v52
    %v71 = vpop.permute.xlu0 %70
    %v77 = vunpack.c.l.b16 %v45
    %v78 = vunpack.c.l.b16 %v46
    %v79 = vunpack.c.l.b16 %v47
    %v80 = vunpack.c.l.b16 %v48
    %v81 = vpack.c.b16 %v78, %v77
    %v82 = vpack.c.b16 %v80, %v79
    %v84 = vunpack.c.l.b16 %v44
    %v85 = vunpack.c.h.b16 %v44
    %v86 = vpack.c.b16 %v84, %v84
    %v87 = vpack.c.b16 %v85, %v85
    %vm88 = vcmask 64512
    %v90 = vsel %vm88, %v81, 0
    %v93 = vsel %vm88, %v82, 0
    %vm95 = vcmask 1043456
    %v97 = vsel %vm95, %v86, 0
    %v100 = vsel %vm95, %v87, 0
    %102 = vmatpush.bf16.msra.mxu0 0
    %103 = vmatpush.bf16.msra.mxu0 0
    %104 = vmatpush.bf16.msra.mxu0 0
    %105 = vmatpush.bf16.msra.mxu0 0
    %106 = vmatpush.bf16.msra.mxu0 0
    %107 = vmatpush.bf16.msra.mxu0 0
    %108 = vmatpush.bf16.msra.mxu0 0
    %109 = vmatpush.bf16.msra.mxu0 %v97
    %110 = vmatmul.bf16.gmra.mxu0 %v90
    %v111 = vpop.f32.mrf.mxu0
    %v112 = vadd.f32 %v56, %v111
    %v113 = vpop.f32.mrf.mxu0
    %v114 = vadd.f32 %v61, %v113
    %115 = vmatmul.bf16.gmra.mxu0 %v93
    %v116 = vpop.f32.mrf.mxu0
    %v117 = vadd.f32 %v66, %v116
    %v118 = vpop.f32.mrf.mxu0
    %v119 = vadd.f32 %v71, %v118
    %120 = vdwg.mxu0
    %121 = vmatpush.bf16.msra.mxu0 0
    %122 = vmatpush.bf16.msra.mxu0 0
    %123 = vmatpush.bf16.msra.mxu0 0
    %124 = vmatpush.bf16.msra.mxu0 0
    %125 = vmatpush.bf16.msra.mxu0 0
    %126 = vmatpush.bf16.msra.mxu0 0
    %127 = vmatpush.bf16.msra.mxu0 0
    %128 = vmatpush.bf16.msra.mxu0 %v100
    %129 = vmatmul.bf16.gmra.mxu0 %v90
    %v130 = vpop.f32.mrf.mxu0
    %v131 = vadd.f32 %v56, %v130
    %v132 = vpop.f32.mrf.mxu0
    %v133 = vadd.f32 %v61, %v132
    %134 = vmatmul.bf16.gmra.mxu0 %v93
    %v135 = vpop.f32.mrf.mxu0
    %v136 = vadd.f32 %v66, %v135
    %v137 = vpop.f32.mrf.mxu0
    %v138 = vadd.f32 %v71, %v137
    %139 = vdwg.mxu0
    %v140 = vmax.f32 %v112, 0.0
    %v141 = vmax.f32 %v131, 0.0
    %v142 = vmax.f32 %v114, 0.0
    %v143 = vmax.f32 %v133, 0.0
    %v144 = vmax.f32 %v117, 0.0
    %v145 = vmax.f32 %v136, 0.0
    %v146 = vmax.f32 %v119, 0.0
    %v147 = vmax.f32 %v138, 0.0
    %v148 = vpack.c.bf16 %v142, %v140
    %v149 = vpack.c.bf16 %v143, %v141
    %v150 = vpack.c.bf16 %v146, %v144
    %v151 = vpack.c.bf16 %v147, %v145
    %v152 = vld [vmem:[%s5] sm:$0xf]
    %v153 = vld [vmem:[%s5 + $0x4] sm:$0xf]
    %v154 = vld [vmem:[%s6] sm:$0xff]
    %v155 = vld [vmem:[%s6 + $0x8] sm:$0xff]
    %157 = vset.pattern.permute.xlu0 0
    %158 = vperm.xlu0 %157, %v154
    %v159 = vpop.permute.xlu0 %158
    %162 = vset.pattern.permute.xlu0 0
    %163 = vperm.xlu0 %162, %v155
    %v164 = vpop.permute.xlu0 %163
    %v168 = vunpack.c.l.b16 %v152
    %v169 = vunpack.c.l.b16 %v153
    %v170 = vpack.c.b16 %v169, %v168
    %vm171 = vcmask 261120
    %v173 = vsel %vm171, %v170, 0
    %175 = vmatpush.bf16.msra.mxu0 0
    %176 = vmatpush.bf16.msra.mxu0 0
    %177 = vmatpush.bf16.msra.mxu0 0
    %178 = vmatpush.bf16.msra.mxu0 0
    %179 = vmatpush.bf16.msra.mxu0 0
    %180 = vmatpush.bf16.msra.mxu0 0
    %181 = vmatpush.bf16.msra.mxu0 %v150
    %182 = vmatpush.bf16.msra.mxu0 %v148
    %183 = vmatmul.bf16.gmra.mxu0 %v173
    %v184 = vpop.f32.mrf.mxu0
    %v185 = vadd.f32 %v159, %v184
    %v186 = vpop.f32.mrf.mxu0
    %v187 = vadd.f32 %v164, %v186
    %188 = vdwg.mxu0
    %189 = vmatpush.bf16.msra.mxu0 0
    %190 = vmatpush.bf16.msra.mxu0 0
    %191 = vmatpush.bf16.msra.mxu0 0
    %192 = vmatpush.bf16.msra.mxu0 0
    %193 = vmatpush.bf16.msra.mxu0 0
    %194 = vmatpush.bf16.msra.mxu0 0
    %195 = vmatpush.bf16.msra.mxu0 %v151
    %196 = vmatpush.bf16.msra.mxu0 %v149
    %197 = vmatmul.bf16.gmra.mxu0 %v173
    %v198 = vpop.f32.mrf.mxu0
    %v199 = vadd.f32 %v159, %v198
    %v200 = vpop.f32.mrf.mxu0
    %v201 = vadd.f32 %v164, %v200
    %202 = vdwg.mxu0
    %v203 = vmax.f32 %v185, 0.0
    %v204 = vmax.f32 %v199, 0.0
    %v205 = vmax.f32 %v187, 0.0
    %v206 = vmax.f32 %v201, 0.0
    %v207 = vpack.c.bf16 %v205, %v203
    %v208 = vpack.c.bf16 %v206, %v204
    %v209 = vld [vmem:[%s7] sm:$0xf]
    %v210 = vld [vmem:[%s8] sm:$0xff]
    %212 = vset.pattern.permute.xlu0 0
    %213 = vperm.xlu0 %212, %v210
    %v214 = vpop.permute.xlu0 %213
    %vm216 = vcmask 130048
    %v218 = vsel %vm216, %v209, 0
    %220 = vmatpush.bf16.msra.mxu0 0
    %221 = vmatpush.bf16.msra.mxu0 0
    %222 = vmatpush.bf16.msra.mxu0 0
    %223 = vmatpush.bf16.msra.mxu0 0
    %224 = vmatpush.bf16.msra.mxu0 0
    %225 = vmatpush.bf16.msra.mxu0 0
    %226 = vmatpush.bf16.msra.mxu0 0
    %227 = vmatpush.bf16.msra.mxu0 %v207
    %228 = vmatmul.bf16.gmra.mxu0 %v218
    %v229 = vpop.f32.mrf.mxu0
    %v230 = vadd.f32 %v214, %v229
    %v231 = vpop.f32.mrf.mxu0
    %232 = vdwg.mxu0
    %233 = vmatpush.bf16.msra.mxu0 0
    %234 = vmatpush.bf16.msra.mxu0 0
    %235 = vmatpush.bf16.msra.mxu0 0
    %236 = vmatpush.bf16.msra.mxu0 0
    %237 = vmatpush.bf16.msra.mxu0 0
    %238 = vmatpush.bf16.msra.mxu0 0
    %239 = vmatpush.bf16.msra.mxu0 0
    %240 = vmatpush.bf16.msra.mxu0 %v208
    %241 = vmatmul.bf16.gmra.mxu0 %v218
    %v242 = vpop.f32.mrf.mxu0
    %v243 = vadd.f32 %v214, %v242
    %v244 = vpop.f32.mrf.mxu0
    %245 = vdwg.mxu0
    %v246 = vmax.f32 %v230, 0.0
    %v247 = vmax.f32 %v243, 0.0
    %v248 = vpack.c.bf16 %v246, %v246
    %v249 = vpack.c.bf16 %v247, %v247
    %v250 = vld [vmem:[%s9] sm:$0x1]
    %v251 = vld [vmem:[#allocation2] sm:$0x1]
    %253 = vset.pattern.permute.xlu0 0
    %254 = vperm.xlu0 %253, %v251
    %v255 = vpop.permute.xlu0 %254
    %v257 = vperm.slane %v255, 0
    %v259 = vsel %vm88, %v250, 0
    %v262 = vsel %vm95, %v248, 0
    %v265 = vsel %vm95, %v249, 0
    %267 = vmatpush.bf16.msra.mxu0 0
    %268 = vmatpush.bf16.msra.mxu0 0
    %269 = vmatpush.bf16.msra.mxu0 0
    %270 = vmatpush.bf16.msra.mxu0 0
    %271 = vmatpush.bf16.msra.mxu0 0
    %272 = vmatpush.bf16.msra.mxu0 0
    %273 = vmatpush.bf16.msra.mxu0 0
    %274 = vmatpush.bf16.msra.mxu0 %v262
    %275 = vmatmul.bf16.gmra.mxu0 %v259
    %v276 = vpop.f32.mrf.mxu0
    %v277 = vadd.f32 %v257, %v276
    %v278 = vpop.f32.mrf.mxu0
    %279 = vdwg.mxu0
    %280 = vmatpush.bf16.msra.mxu0 0
    %281 = vmatpush.bf16.msra.mxu0 0
    %282 = vmatpush.bf16.msra.mxu0 0
    %283 = vmatpush.bf16.msra.mxu0 0
    %284 = vmatpush.bf16.msra.mxu0 0
    %285 = vmatpush.bf16.msra.mxu0 0
    %286 = vmatpush.bf16.msra.mxu0 0
    %287 = vmatpush.bf16.msra.mxu0 %v265
    %288 = vmatmul.bf16.gmra.mxu0 %v259
    %v289 = vpop.f32.mrf.mxu0
    %v290 = vadd.f32 %v257, %v289
    %v291 = vpop.f32.mrf.mxu0
    %292 = vdwg.mxu0
    %v295 = vrot.slane %v290, 4
    %v296 = vsel %vm95, %v277, %v295
    %v299 = vunpack.c.l.s4 1935823168
    %v300 = vunpack.c.0.s8 %v299
    %v301 = vperm.slane %v296, %v300
    %v302 = vld [vmem:[%s1] sm:$0x1]
    %v303 = vunpack.c.l.bf16 %v302
    %v304 = vsub.f32 %v303, 1.0
    %v305 = vmul.f32 %v304, 1000000.0
    %v306 = vadd.f32 %v301, %v305
    %307 = vst [vmem:[#allocation3] sm:$0x3] %v306
    %vm308 = vcmask 1041408
    %v309 = vsel %vm308, %v306, -inf
    %310 = vmax.xlane.f32.xlu0 %v309
    %v311 = vpop.xlane.xlu0 %310
    %v312 = vsub.f32 %v306, %v311
    %v313 = vmul.f32 %v312, 1.442695
    %v314 = vpow.pop %v313
    %v315 = vsel %vm308, %v314, 0.0
    %316 = vadd.xlane.f32.xlu0 %v315
    %v317 = vpop.xlane.xlu0 %316
    %v318 = vlog2.pop %v317
    %v319 = vmul.f32 %v318, 0.6931472
    %v320 = vadd.f32 %v311, %v319
    %v321 = vlaneseq
    %v322 = vand.u32 %v321, 127
    %v323 = vld [vmem:[%s2] sm:$0x3]
    %324 = vset.pattern.permute.xlu0 0
    %325 = vperm.xlu0 %324, %v323
    %v326 = vpop.permute.xlu0 %325
    %vm327 = vcmp.eq.s32.totalorder %v322, %v326
    %v328 = vsel %vm327, %v306, 0.0
    %v329 = vsel %vm308, %v328, 0.0
    %330 = vadd.xlane.f32.xlu0 %v329
    %v331 = vpop.xlane.xlu0 %330
    %v332 = vsub.f32 %v331, %v320
    %vm333 = vcmask 1024
    %334 = vst.msk [vmem:[%s12] sm:$0x3] %vm333, %v332
    // Predicated region
    $region46: #{tpu_custom_call.1} parent=1 // pred_check
      _
    $region47: #{tpu_custom_call.1} parent=1 // pred_check_branch
      %336 = sbr.rel (0) target = $region49
    $region48: #{tpu_custom_call.1} parent=1 // pred_region
      %338 = vsyncadd [#allocation4], 0
      %s340 = sshll.u32 [#allocation3], 4
      %s341 = int_to_ptr.vmem [resolvable:$true] %s340
      %s342 = sshll.u32 %s11, 4
      %s343 = int_to_ptr.hbm [resolvable:$true] %s342
      %345 = dma.vmem_to_hbm [thread:$0]  %s341, 32, %s343, [#allocation4]
    $region49: #{tpu_custom_call.1} parent=1 // pred_fallthru
      _
    // Predicated region
    $region50: #{tpu_custom_call.1} parent=1 // pred_check
      _
    $region51: #{tpu_custom_call.1} parent=1 // pred_check_branch
      %347 = sbr.rel (0) target = $region53
    $region52: #{tpu_custom_call.1} parent=1 // pred_region
      _
    $region53: #{tpu_custom_call.1} parent=1 // pred_fallthru
      _
    // Predicated region
    $region54: #{tpu_custom_call.1} parent=1 // pred_check
      _
    $region55: #{tpu_custom_call.1} parent=1 // pred_check_branch
      %349 = sbr.rel (0) target = $region57
    $region56: #{tpu_custom_call.1} parent=1 // pred_region
      %351 = dma.done [#allocation4], 32
    $region57: #{tpu_custom_call.1} parent=1 // pred_fallthru
      _
    // Predicated region
    $region58: #{tpu_custom_call.1} parent=1 // pred_check
      _
    $region59: #{tpu_custom_call.1} parent=1 // pred_check_branch
      %353 = sbr.rel (0) target = $region61
    $region60: #{tpu_custom_call.1} parent=1 // pred_region
      _
    $region61: #{tpu_custom_call.1} parent=1 // pred_fallthru
      _
    %354 = vsyncpa [#allocation4], 1

</llo_original>
